<compile_context>
chip_gen: v7x
topology: tpu7x:2x2x1
jax: 0.10.0
libtpu: 0.0.40
codegen_flags: <defaults>
</compile_context>

<pallas_src>
import jax
import jax.numpy as jnp
from jax.experimental import pallas as pl
from jax.experimental.pallas import tpu as pltpu

VOCAB = 8
EMB = 3            # == nn.RNN input_size
HIDDEN = 32
SEQ = 4            # time dimension (dim 0 into nn.RNN)
BATCH = 3          # SEQ * BATCH == 12  ->  view(4, -1) == (4, HIDDEN * EMB)
PADB = 8           # batch padded to the native sublane count
NTOK = SEQ * PADB  # 32 padded (timestep, batch-row) slots
OUT_W = 128        # lane-dense output width

# Packed-parameter slab layout: [ROWS, 128] f32, one HBM->VMEM DMA.
R_EMB = 0                   # rows  0..7   : emb_table [VOCAB, EMB]  in lanes 0:EMB
R_WIH = R_EMB + VOCAB       # rows  8..39  : W_ih      [HIDDEN, EMB] in lanes 0:EMB
R_BIH = R_WIH + HIDDEN      # row  40      : b_ih                    in lanes 0:HIDDEN
R_BHH = R_BIH + 1           # row  41      : b_hh                    in lanes 0:HIDDEN
R_BLIN = R_BHH + 1          # row  42      : b_lin                   in lane  0
R_WLIN = 48                 # rows 48..55  : W_lin.view(BATCH,HIDDEN), zero-padded to PADB
ROWS = R_WLIN + PADB        # 56 rows (multiple of 8)


def text_rnn_kernel(idx_ref, par_ref, whh_t_ref, out_ref):
    """Fused embedding + tanh Elman RNN + Linear head, single invocation in VMEM.

    idx_ref:   [NTOK, 1]        int32 token ids; sublane-padded rows hold -1
    par_ref:   [ROWS, 128]      packed f32 parameter slab (layout above)
    whh_t_ref: [HIDDEN, HIDDEN] W_hh already transposed (W_hh.T)
    out_ref:   [1, OUT_W]       lane-dense output row; lanes 0..SEQ-1 hold y
    """
    f32 = jnp.float32

    # ---- hoisted parameter loads (static sub-views of the one slab) ----
    emb = par_ref[R_EMB:R_EMB + VOCAB, :EMB]                       # [VOCAB, EMB]
    wih = par_ref[R_WIH:R_WIH + HIDDEN, :EMB]                      # [HIDDEN, EMB]
    bias = (par_ref[R_BIH:R_BIH + 1, :HIDDEN] +
            par_ref[R_BHH:R_BHH + 1, :HIDDEN])                     # [1, HIDDEN]
    blin = par_ref[R_BLIN:R_BLIN + 1, :1]                          # [1, 1]
    wlin = par_ref[R_WLIN:R_WLIN + PADB, :HIDDEN]                  # [PADB, HIDDEN], pad rows 0
    whh_t = whh_t_ref[...]                                         # [H, H] == W_hh.T

    # ---- fused embedding gather + input projection, off the serial chain:
    #      x_proj = one_hot(idx) @ (emb_table @ W_ih^T) + (b_ih + b_hh)
    emb_proj = jax.lax.dot_general(emb, wih, (((1,), (1,)), ((), ())),
                                   preferred_element_type=f32)     # [VOCAB, HIDDEN]
    lane_v = jax.lax.broadcasted_iota(jnp.int32, (NTOK, VOCAB), 1)
    one_hot = (lane_v == idx_ref[...]).astype(f32)                 # pad rows (-1) -> all zero
    x_proj = jnp.dot(one_hot, emb_proj,
                     preferred_element_type=f32) + bias            # [NTOK, HIDDEN]

    # ---- per-timestep linear head: y_t = <h_t, W_lin.view(BATCH, HIDDEN)> ----
    def head(h):                                                   # [PADB, H] -> [1, 1]
        return jnp.sum(jnp.sum(h * wlin, axis=1, keepdims=True),
                       axis=0, keepdims=True)

    lane = jax.lax.broadcasted_iota(jnp.int32, (1, OUT_W), 1)

    # ---- serial tanh recurrence, static unroll; states stay in vregs (no scratch) --
    h = jnp.tanh(x_proj[:PADB, :])                                 # t == 0: h0 == 0 -> skip W_hh
    y = jnp.where(lane == 0, head(h), jnp.zeros((1, OUT_W), f32))
    for t in range(1, SEQ):                                        # static unroll (SEQ == 4)
        h = jnp.tanh(x_proj[t * PADB:(t + 1) * PADB, :] +
                     jnp.dot(h, whh_t, preferred_element_type=f32))  # [PADB, H]
        y = jnp.where(lane == t, head(h), y)
    # Padded batch rows (b >= BATCH) evolve independently (row-wise ops only) and are
    # masked out by the zero rows of wlin inside head().

    out_ref[...] = y + blin                                        # lane-dense unmasked store


@jax.jit
def text_rnn_forward(input_batch, emb_table, w_ih, w_hh, b_ih, b_hh,
                     w_lin, b_lin):
    # view(4,-1) width only matches Linear in_features because BATCH == EMB.
    assert BATCH * HIDDEN == HIDDEN * EMB, "outputs.view(4,-1) width mismatch"

    # Token ids, sublane-padded to PADB (pad slots get -1 -> all-zero one-hot rows),
    # flattened row-major so row i <-> (t = i // PADB, b = i % PADB).
    idx_pad = jnp.pad(input_batch, ((0, 0), (0, PADB - BATCH)),
                      constant_values=-1).reshape(NTOK, 1)

    # One lane-dense f32 parameter slab (single HBM->VMEM DMA in the kernel).
    params = (jnp.zeros((ROWS, 128), jnp.float32)
              .at[R_EMB:R_EMB + VOCAB, :EMB].set(emb_table)
              .at[R_WIH:R_WIH + HIDDEN, :EMB].set(w_ih)
              .at[R_BIH, :HIDDEN].set(b_ih)
              .at[R_BHH, :HIDDEN].set(b_hh)
              .at[R_BLIN, :1].set(b_lin)
              .at[R_WLIN:R_WLIN + BATCH, :HIDDEN].set(w_lin.reshape(BATCH, HIDDEN)))

    vmem = lambda: pl.BlockSpec(memory_space=pltpu.MemorySpace.VMEM)
    y_pad = pl.pallas_call(
        text_rnn_kernel,
        out_shape=jax.ShapeDtypeStruct((1, OUT_W), jnp.float32),
        in_specs=[vmem(), vmem(), vmem()],
        out_specs=vmem(),
    )(idx_pad, params, jnp.transpose(w_hh))                        # W_hh pre-transposed

    return y_pad[0, :SEQ].reshape(SEQ, 1)                          # [4, 1], as in the module


def reference_forward(input_batch, emb_table, w_ih, w_hh, b_ih, b_hh,
                      w_lin, b_lin):
    """Pure-JAX reference mirroring the PyTorch forward exactly."""
    x = emb_table[input_batch]                       # [SEQ, BATCH, EMB]
    h = jnp.zeros((BATCH, HIDDEN), jnp.float32)
    outs = []
    for t in range(SEQ):
        h = jnp.tanh(x[t] @ w_ih.T + b_ih + h @ w_hh.T + b_hh)
        outs.append(h)
    outs = jnp.stack(outs, axis=0).reshape(SEQ, -1)  # outputs.view(4, -1)
    return outs @ w_lin.T + b_lin                    # [4, 1]


if __name__ == "__main__":
    key = jax.random.PRNGKey(0)
    k_idx, k_emb, k_wih, k_whh, k_bih, k_bhh, k_wl, k_bl = jax.random.split(key, 8)

    # NOTE: the PyTorch forward ignores its argument `x` and uses the global
    # `input_batch`; we pass input_batch explicitly here.
    input_batch = jax.random.randint(k_idx, (SEQ, BATCH), 0, VOCAB, dtype=jnp.int32)

    # Deterministic synthetic parameters (shapes from the module's __init__).
    emb_table = jax.random.normal(k_emb, (VOCAB, EMB), jnp.float32)             # nn.Embedding
    bound = 1.0 / (HIDDEN ** 0.5)
    w_ih = jax.random.uniform(k_wih, (HIDDEN, EMB), jnp.float32, -bound, bound)     # nn.RNN W_ih
    w_hh = jax.random.uniform(k_whh, (HIDDEN, HIDDEN), jnp.float32, -bound, bound)  # nn.RNN W_hh
    b_ih = jax.random.uniform(k_bih, (HIDDEN,), jnp.float32, -bound, bound)
    b_hh = jax.random.uniform(k_bhh, (HIDDEN,), jnp.float32, -bound, bound)
    lin_bound = 1.0 / ((HIDDEN * EMB) ** 0.5)
    w_lin = jax.random.uniform(k_wl, (1, HIDDEN * EMB), jnp.float32, -lin_bound, lin_bound)
    b_lin = jax.random.uniform(k_bl, (1,), jnp.float32, -lin_bound, lin_bound)

    out = text_rnn_forward(input_batch, emb_table, w_ih, w_hh, b_ih, b_hh,
                           w_lin, b_lin)
    out = jax.block_until_ready(out)

    ref = reference_forward(input_batch, emb_table, w_ih, w_hh, b_ih, b_hh,
                            w_lin, b_lin)
    assert out.shape == (4, 1), out.shape
    assert jnp.allclose(out, ref, atol=5e-5, rtol=5e-5), (out, ref)
    print("KERNEL_OK")
</pallas_src>

<mosaic_0001>
module attributes {stable_mosaic.version = 11 : i64} {
  func.func @text_rnn_kernel(%arg0: memref<32x1xi32, #tpu.memory_space<vmem>>, %arg1: memref<56x128xf32, #tpu.memory_space<vmem>>, %arg2: memref<32x32xf32, #tpu.memory_space<vmem>>, %arg3: memref<1x128xf32, #tpu.memory_space<vmem>>) attributes {dimension_semantics = [], scalar_prefetch = 0 : i64, scratch_operands = 0 : i64, tpu.core_type = #tpu.core_type<tc>} {
    %c0 = arith.constant 0 : index
    %c0_0 = arith.constant 0 : index
    %0 = vector.load %arg1[%c0, %c0_0] : memref<56x128xf32, #tpu.memory_space<vmem>>, vector<8x3xf32>
    %c8 = arith.constant 8 : index
    %c0_1 = arith.constant 0 : index
    %1 = vector.load %arg1[%c8, %c0_1] : memref<56x128xf32, #tpu.memory_space<vmem>>, vector<32x3xf32>
    %c40 = arith.constant 40 : index
    %c0_2 = arith.constant 0 : index
    %2 = vector.load %arg1[%c40, %c0_2] : memref<56x128xf32, #tpu.memory_space<vmem>>, vector<1x32xf32>
    %c41 = arith.constant 41 : index
    %c0_3 = arith.constant 0 : index
    %3 = vector.load %arg1[%c41, %c0_3] : memref<56x128xf32, #tpu.memory_space<vmem>>, vector<1x32xf32>
    %4 = arith.addf %2, %3 : vector<1x32xf32>
    %c42 = arith.constant 42 : index
    %c0_4 = arith.constant 0 : index
    %5 = vector.load %arg1[%c42, %c0_4] : memref<56x128xf32, #tpu.memory_space<vmem>>, vector<1x1xf32>
    %c48 = arith.constant 48 : index
    %c0_5 = arith.constant 0 : index
    %6 = vector.load %arg1[%c48, %c0_5] : memref<56x128xf32, #tpu.memory_space<vmem>>, vector<8x32xf32>
    %c0_6 = arith.constant 0 : index
    %c0_7 = arith.constant 0 : index
    %7 = vector.load %arg2[%c0_6, %c0_7] : memref<32x32xf32, #tpu.memory_space<vmem>>, vector<32x32xf32>
    %cst = arith.constant dense<0.000000e+00> : vector<8x32xf32>
    %8 = tpu.matmul %0, %1, %cst {dimension_numbers = #tpu.dot_dimension_numbers<[1], [1], [0], [0], [0, 0, 1, 0], [], []>} : vector<8x3xf32>, vector<32x3xf32>, vector<8x32xf32> -> vector<8x32xf32>
    %9 = tpu.iota {dimensions = array<i32: 1>} : vector<32x8xi32>
    %c0_8 = arith.constant 0 : index
    %c0_9 = arith.constant 0 : index
    %10 = vector.load %arg0[%c0_8, %c0_9] : memref<32x1xi32, #tpu.memory_space<vmem>>, vector<32x1xi32>
    %11 = vector.broadcast %10 : vector<32x1xi32> to vector<32x8xi32>
    %12 = arith.cmpi eq, %9, %11 : vector<32x8xi32>
    %13 = arith.extui %12 : vector<32x8xi1> to vector<32x8xi32>
    %14 = arith.sitofp %13 : vector<32x8xi32> to vector<32x8xf32>
    %cst_10 = arith.constant dense<0.000000e+00> : vector<32x32xf32>
    %15 = tpu.matmul %14, %8, %cst_10 {dimension_numbers = #tpu.dot_dimension_numbers<[1], [0], [0], [1], [0, 0, 1, 1], [], []>} : vector<32x8xf32>, vector<8x32xf32>, vector<32x32xf32> -> vector<32x32xf32>
    %16 = vector.broadcast %4 : vector<1x32xf32> to vector<32x32xf32>
    %17 = arith.addf %15, %16 : vector<32x32xf32>
    %18 = tpu.iota {dimensions = array<i32: 1>} : vector<1x128xi32>
    %19 = vector.extract_strided_slice %17 {offsets = [0, 0], sizes = [8, 32], strides = [1, 1]} : vector<32x32xf32> to vector<8x32xf32>
    %20 = math.tanh %19 : vector<8x32xf32>
    %c0_i32 = arith.constant 0 : i32
    %21 = vector.broadcast %c0_i32 : i32 to vector<1x128xi32>
    %22 = arith.cmpi eq, %18, %21 : vector<1x128xi32>
    %23 = arith.mulf %20, %6 : vector<8x32xf32>
    %cst_11 = arith.constant dense<0.000000e+00> : vector<8xf32>
    %24 = vector.multi_reduction <add>, %23, %cst_11 [1] : vector<8x32xf32> to vector<8xf32>
    %25 = vector.shape_cast %24 : vector<8xf32> to vector<8x1xf32>
    %cst_12 = arith.constant dense<0.000000e+00> : vector<1xf32>
    %26 = vector.multi_reduction <add>, %25, %cst_12 [0] : vector<8x1xf32> to vector<1xf32>
    %27 = vector.shape_cast %26 : vector<1xf32> to vector<1x1xf32>
    %cst_13 = arith.constant 0.000000e+00 : f32
    %28 = vector.broadcast %cst_13 : f32 to vector<1x128xf32>
    %29 = vector.shape_cast %27 : vector<1x1xf32> to vector<1x1xf32>
    %30 = vector.broadcast %29 : vector<1x1xf32> to vector<1x128xf32>
    %31 = arith.select %22, %30, %28 : vector<1x128xi1>, vector<1x128xf32>
    %32 = vector.extract_strided_slice %17 {offsets = [8, 0], sizes = [8, 32], strides = [1, 1]} : vector<32x32xf32> to vector<8x32xf32>
    %cst_14 = arith.constant dense<0.000000e+00> : vector<8x32xf32>
    %33 = tpu.matmul %20, %7, %cst_14 {dimension_numbers = #tpu.dot_dimension_numbers<[1], [0], [0], [1], [0, 0, 1, 1], [], []>} : vector<8x32xf32>, vector<32x32xf32>, vector<8x32xf32> -> vector<8x32xf32>
    %34 = arith.addf %32, %33 : vector<8x32xf32>
    %35 = math.tanh %34 : vector<8x32xf32>
    %c1_i32 = arith.constant 1 : i32
    %36 = vector.broadcast %c1_i32 : i32 to vector<1x128xi32>
    %37 = arith.cmpi eq, %18, %36 : vector<1x128xi32>
    %38 = arith.mulf %35, %6 : vector<8x32xf32>
    %cst_15 = arith.constant dense<0.000000e+00> : vector<8xf32>
    %39 = vector.multi_reduction <add>, %38, %cst_15 [1] : vector<8x32xf32> to vector<8xf32>
    %40 = vector.shape_cast %39 : vector<8xf32> to vector<8x1xf32>
    %cst_16 = arith.constant dense<0.000000e+00> : vector<1xf32>
    %41 = vector.multi_reduction <add>, %40, %cst_16 [0] : vector<8x1xf32> to vector<1xf32>
    %42 = vector.shape_cast %41 : vector<1xf32> to vector<1x1xf32>
    %43 = vector.shape_cast %42 : vector<1x1xf32> to vector<1x1xf32>
    %44 = vector.broadcast %43 : vector<1x1xf32> to vector<1x128xf32>
    %45 = arith.select %37, %44, %31 : vector<1x128xi1>, vector<1x128xf32>
    %46 = vector.extract_strided_slice %17 {offsets = [16, 0], sizes = [8, 32], strides = [1, 1]} : vector<32x32xf32> to vector<8x32xf32>
    %cst_17 = arith.constant dense<0.000000e+00> : vector<8x32xf32>
    %47 = tpu.matmul %35, %7, %cst_17 {dimension_numbers = #tpu.dot_dimension_numbers<[1], [0], [0], [1], [0, 0, 1, 1], [], []>} : vector<8x32xf32>, vector<32x32xf32>, vector<8x32xf32> -> vector<8x32xf32>
    %48 = arith.addf %46, %47 : vector<8x32xf32>
    %49 = math.tanh %48 : vector<8x32xf32>
    %c2_i32 = arith.constant 2 : i32
    %50 = vector.broadcast %c2_i32 : i32 to vector<1x128xi32>
    %51 = arith.cmpi eq, %18, %50 : vector<1x128xi32>
    %52 = arith.mulf %49, %6 : vector<8x32xf32>
    %cst_18 = arith.constant dense<0.000000e+00> : vector<8xf32>
    %53 = vector.multi_reduction <add>, %52, %cst_18 [1] : vector<8x32xf32> to vector<8xf32>
    %54 = vector.shape_cast %53 : vector<8xf32> to vector<8x1xf32>
    %cst_19 = arith.constant dense<0.000000e+00> : vector<1xf32>
    %55 = vector.multi_reduction <add>, %54, %cst_19 [0] : vector<8x1xf32> to vector<1xf32>
    %56 = vector.shape_cast %55 : vector<1xf32> to vector<1x1xf32>
    %57 = vector.shape_cast %56 : vector<1x1xf32> to vector<1x1xf32>
    %58 = vector.broadcast %57 : vector<1x1xf32> to vector<1x128xf32>
    %59 = arith.select %51, %58, %45 : vector<1x128xi1>, vector<1x128xf32>
    %60 = vector.extract_strided_slice %17 {offsets = [24, 0], sizes = [8, 32], strides = [1, 1]} : vector<32x32xf32> to vector<8x32xf32>
    %cst_20 = arith.constant dense<0.000000e+00> : vector<8x32xf32>
    %61 = tpu.matmul %49, %7, %cst_20 {dimension_numbers = #tpu.dot_dimension_numbers<[1], [0], [0], [1], [0, 0, 1, 1], [], []>} : vector<8x32xf32>, vector<32x32xf32>, vector<8x32xf32> -> vector<8x32xf32>
    %62 = arith.addf %60, %61 : vector<8x32xf32>
    %63 = math.tanh %62 : vector<8x32xf32>
    %c3_i32 = arith.constant 3 : i32
    %64 = vector.broadcast %c3_i32 : i32 to vector<1x128xi32>
    %65 = arith.cmpi eq, %18, %64 : vector<1x128xi32>
    %66 = arith.mulf %63, %6 : vector<8x32xf32>
    %cst_21 = arith.constant dense<0.000000e+00> : vector<8xf32>
    %67 = vector.multi_reduction <add>, %66, %cst_21 [1] : vector<8x32xf32> to vector<8xf32>
    %68 = vector.shape_cast %67 : vector<8xf32> to vector<8x1xf32>
    %cst_22 = arith.constant dense<0.000000e+00> : vector<1xf32>
    %69 = vector.multi_reduction <add>, %68, %cst_22 [0] : vector<8x1xf32> to vector<1xf32>
    %70 = vector.shape_cast %69 : vector<1xf32> to vector<1x1xf32>
    %71 = vector.shape_cast %70 : vector<1x1xf32> to vector<1x1xf32>
    %72 = vector.broadcast %71 : vector<1x1xf32> to vector<1x128xf32>
    %73 = arith.select %65, %72, %59 : vector<1x128xi1>, vector<1x128xf32>
    %74 = vector.broadcast %5 : vector<1x1xf32> to vector<1x128xf32>
    %75 = arith.addf %73, %74 : vector<1x128xf32>
    %c0_23 = arith.constant 0 : index
    %c0_24 = arith.constant 0 : index
    %76 = vector.load %arg3[%c0_23, %c0_24] : memref<1x128xf32, #tpu.memory_space<vmem>>, vector<1x128xf32>
    tpu.vector_store %arg3[%c0_23, %c0_24], %75 {strides = array<i32>} : memref<1x128xf32, #tpu.memory_space<vmem>>, vector<1x128xf32>,
    return
  }
}

</mosaic_0001>

<llo_original>
// kernel: text_rnn_forward.1
$region0: #{text_rnn_forward.1}
  #allocation0 [shape = 'u32[]', space=smem, size = 0x4, offset = 0x4, fixed_abs, tag = 'smem constant byte address 0x4 - core index']
  #allocation1 [shape = 'u32[144,128]{1,0:T(1,128)}', space=vmem, size = 0x12000, scoped, tag = 'internal scratch']
  %s0 = inlined_call_operand.vmem [shape: s32[32,1], index: 0, kind: input, shape index: {}]
  %s1 = inlined_call_operand.vmem [shape: f32[56,128], index: 1, kind: input, shape index: {}]
  %s2 = inlined_call_operand.vmem [shape: f32[32,32], index: 2, kind: input, shape index: {}]
  %s3 = inlined_call_operand.vmem [shape: f32[1,128], index: 3, kind: output, shape index: {}]
  %s4 = sld [smem:[#allocation0]]
  $region22: #{text_rnn_forward.1} parent=0
    _
  %s6 = ssub.s32 1, %s4
  %s7 = scalar_select 0, %s6, %s4
  // Predicated region
  $region2: #{text_rnn_forward.1} parent=0 // pred_check
    _
  $region3: #{text_rnn_forward.1} parent=0 // pred_check_branch
    %9 = sbr.rel (0) target = $region5
  $region4: #{text_rnn_forward.1} parent=0 // pred_region
    _
  $region5: #{text_rnn_forward.1} parent=0 // pred_fallthru
    _
  // Predicated region
  $region6: #{text_rnn_forward.1} parent=0 // pred_check
    _
  $region7: #{text_rnn_forward.1} parent=0 // pred_check_branch
    %11 = sbr.rel (0) target = $region9
  $region8: #{text_rnn_forward.1} parent=0 // pred_region
    _
  $region9: #{text_rnn_forward.1} parent=0 // pred_fallthru
    _
  // Predicated region
  $region10: #{text_rnn_forward.1} parent=0 // pred_check
    _
  $region11: #{text_rnn_forward.1} parent=0 // pred_check_branch
    %13 = sbr.rel (0) target = $region13
  $region12: #{text_rnn_forward.1} parent=0 // pred_region
    _
  $region13: #{text_rnn_forward.1} parent=0 // pred_fallthru
    _
  %v14 = vld [vmem:[%s1] sm:$0xff]
  %v15 = vld [vmem:[%s1 + $0x8] sm:$0xff]
  %v16 = vld [vmem:[%s1 + $0x10] sm:$0xff]
  %v17 = vld [vmem:[%s1 + $0x18] sm:$0xff]
  %v18 = vld [vmem:[%s1 + $0x20] sm:$0xff]
  %v19 = vld [vmem:[%s1 + $0x28] sm:$0x1]
  %v20 = vld [vmem:[%s1 + $0x29] sm:$0x1]
  %v21 = vadd.f32 %v19, %v20
  %v22 = vld [vmem:[%s1 + $0x2a] sm:$0x1]
  %v23 = vld [vmem:[%s1 + $0x30] sm:$0xff]
  %v24 = vld [vmem:[%s2] sm:$0xff]
  %v25 = vld [vmem:[%s2 + $0x8] sm:$0xff]
  %v26 = vld [vmem:[%s2 + $0x10] sm:$0xff]
  %v27 = vld [vmem:[%s2 + $0x18] sm:$0xff]
  %vm28 = vcmask 23552
  %v30 = vsel %vm28, %v14, 0
  %v33 = vsel %vm28, %v15, 0
  %v36 = vsel %vm28, %v16, 0
  %v39 = vsel %vm28, %v17, 0
  %v42 = vsel %vm28, %v18, 0
  %44 = vmatprep.subr.mxu0 0.0
  %45 = vmatpush1.xpose.msra.mxu0 %v33
  %46 = vmatprep.subr.mxu0 0.0
  %47 = vmatpush1.xpose.msra.mxu0 %v36
  %48 = vmatprep.subr.mxu0 0.0
  %49 = vmatpush1.xpose.msra.mxu0 %v39
  %50 = vmatprep.subr.mxu0 0.0
  %51 = vmatpush1.xpose.msra.mxu0 %v42
  %52 = vmatprep.subr.mxu0 0.0
  %53 = vmatpush1.xpose.msra.mxu0 0.0
  %54 = vmatprep.subr.mxu0 0.0
  %55 = vmatpush1.xpose.msra.mxu0 0.0
  %56 = vmatprep.subr.mxu0 0.0
  %57 = vmatpush1.xpose.msra.mxu0 0.0
  %58 = vmatprep.subr.mxu0 0.0
  %59 = vmatpush1.xpose.msra.mxu0 0.0
  %60 = vmatprep.subr.mxu0 0.0
  %61 = vmatpush1.xpose.msra.mxu0 0.0
  %62 = vmatprep.subr.mxu0 0.0
  %63 = vmatpush1.xpose.msra.mxu0 0.0
  %64 = vmatprep.subr.mxu0 0.0
  %65 = vmatpush1.xpose.msra.mxu0 0.0
  %66 = vmatprep.subr.mxu0 0.0
  %67 = vmatpush1.xpose.msra.mxu0 0.0
  %68 = vmatprep.subr.mxu0 0.0
  %69 = vmatpush1.xpose.msra.mxu0 0.0
  %70 = vmatprep.subr.mxu0 0.0
  %71 = vmatpush1.xpose.msra.mxu0 0.0
  %72 = vmatprep.subr.mxu0 0.0
  %73 = vmatpush1.xpose.msra.mxu0 0.0
  %74 = vmatprep.subr.mxu0 0.0
  %75 = vmatpush1.xpose.msra.mxu0 0.0
  %76 = vmatprep.subr.mxu0 0.0
  %77 = vmatpush1.xpose.msra.mxu0 0.0
  %78 = vmatprep.subr.mxu0 0.0
  %79 = vmatpush1.xpose.msra.mxu0 0.0
  %80 = vmatprep.subr.mxu0 0.0
  %81 = vmatpush1.xpose.msra.mxu0 0.0
  %82 = vmatprep.subr.mxu0 0.0
  %83 = vmatpush1.xpose.msra.mxu0 0.0
  %84 = vmatprep.subr.mxu0 0.0
  %85 = vmatpush1.xpose.msra.mxu0 0.0
  %86 = vmatprep.subr.mxu0 0.0
  %87 = vmatpush1.xpose.msra.mxu0 0.0
  %88 = vmatprep.subr.mxu0 0.0
  %89 = vmatpush1.xpose.msra.mxu0 0.0
  %90 = vmatprep.subr.mxu0 0.0
  %91 = vmatpush1.xpose.msra.mxu0 0.0
  %92 = vmatprep.subr.mxu0 0.0
  %93 = vmatpush1.xpose.msra.mxu0 0.0
  %94 = vmatprep.subr.mxu0 0.0
  %95 = vmatpush1.xpose.msra.mxu0 0.0
  %96 = vmatprep.subr.mxu0 0.0
  %97 = vmatpush1.xpose.msra.mxu0 0.0
  %98 = vmatprep.subr.mxu0 0.0
  %99 = vmatpush1.xpose.msra.mxu0 0.0
  %100 = vmatprep.subr.mxu0 0.0
  %101 = vmatpush1.xpose.msra.mxu0 0.0
  %102 = vmatprep.subr.mxu0 0.0
  %103 = vmatpush1.xpose.msra.mxu0 0.0
  %104 = vmatprep.subr.mxu0 0.0
  %105 = vmatpush1.xpose.msra.mxu0 0.0
  %106 = vmatprep.subr.mxu0 0.0
  %107 = vmatpush1.xpose.msra.mxu0 0.0
  %108 = vmatprep.mubr.f32.mxu0 0.0
  %109 = vmatmul.mubr.f32.gmra.mrb[0].mxu0 %v30
  %v110 = vpop.f32.mrb[0].mxu0
  %v111 = vadd.f32 0.0, %v110
  %v112 = vpop.f32.mrb[0].mxu0
  %113 = vdwg.mxu0
  %v114 = vlaneseq
  %v115 = vand.u32 %v114, 127
  %v116 = vld [vmem:[%s0] sm:$0xff]
  %v117 = vld [vmem:[%s0 + $0x8] sm:$0xff]
  %v118 = vld [vmem:[%s0 + $0x10] sm:$0xff]
  %v119 = vld [vmem:[%s0 + $0x18] sm:$0xff]
  %120 = vset.pattern.permute.xlu0 0
  %121 = vperm.xlu0 %120, %v116
  %v122 = vpop.permute.xlu0 %121
  %123 = vset.pattern.permute.xlu0 0
  %124 = vperm.xlu0 %123, %v117
  %v125 = vpop.permute.xlu0 %124
  %126 = vset.pattern.permute.xlu0 0
  %127 = vperm.xlu0 %126, %v118
  %v128 = vpop.permute.xlu0 %127
  %129 = vset.pattern.permute.xlu0 0
  %130 = vperm.xlu0 %129, %v119
  %v131 = vpop.permute.xlu0 %130
  %vm132 = vcmp.eq.s32.totalorder %v115, %v122
  %vm133 = vcmp.eq.s32.totalorder %v115, %v125
  %vm134 = vcmp.eq.s32.totalorder %v115, %v128
  %vm135 = vcmp.eq.s32.totalorder %v115, %v131
  %v136 = vsel %vm132, 1, 0
  %v137 = vsel %vm133, 1, 0
  %v138 = vsel %vm134, 1, 0
  %v139 = vsel %vm135, 1, 0
  %v140 = vcvt.s32.f32 %v136
  %v141 = vcvt.s32.f32 %v137
  %v142 = vcvt.s32.f32 %v138
  %v143 = vcvt.s32.f32 %v139
  %v144 = vlaneseq
  %v145 = vshrl.u32 %v144, 7
  %v146 = vsub.s32 0, %v145
  %v147 = vrot.slane %v21, %v146
  %vm148 = vcmask 64512
  %v150 = vsel %vm148, %v140, 0
  %v153 = vsel %vm148, %v141, 0
  %v156 = vsel %vm148, %v142, 0
  %v159 = vsel %vm148, %v143, 0
  %161 = vmatprep.subr.mxu0 0.0
  %162 = vmatpush1.msra.mxu0 %v111
  %163 = vmatprep.subr.mxu0 0.0
  %164 = vmatpush1.msra.mxu0 0.0
  %165 = vmatprep.subr.mxu0 0.0
  %166 = vmatpush1.msra.mxu0 0.0
  %167 = vmatprep.subr.mxu0 0.0
  %168 = vmatpush1.msra.mxu0 0.0
  %169 = vmatprep.subr.mxu0 0.0
  %170 = vmatpush1.msra.mxu0 0.0
  %171 = vmatprep.subr.mxu0 0.0
  %172 = vmatpush1.msra.mxu0 0.0
  %173 = vmatprep.subr.mxu0 0.0
  %174 = vmatpush1.msra.mxu0 0.0
  %175 = vmatprep.subr.mxu0 0.0
  %176 = vmatpush1.msra.mxu0 0.0
  %177 = vmatprep.subr.mxu0 0.0
  %178 = vmatpush1.msra.mxu0 0.0
  %179 = vmatprep.subr.mxu0 0.0
  %180 = vmatpush1.msra.mxu0 0.0
  %181 = vmatprep.subr.mxu0 0.0
  %182 = vmatpush1.msra.mxu0 0.0
  %183 = vmatprep.subr.mxu0 0.0
  %184 = vmatpush1.msra.mxu0 0.0
  %185 = vmatprep.subr.mxu0 0.0
  %186 = vmatpush1.msra.mxu0 0.0
  %187 = vmatprep.subr.mxu0 0.0
  %188 = vmatpush1.msra.mxu0 0.0
  %189 = vmatprep.subr.mxu0 0.0
  %190 = vmatpush1.msra.mxu0 0.0
  %191 = vmatprep.subr.mxu0 0.0
  %192 = vmatpush1.msra.mxu0 0.0
  %193 = vmatprep.subr.mxu0 0.0
  %194 = vmatpush1.msra.mxu0 0.0
  %195 = vmatprep.subr.mxu0 0.0
  %196 = vmatpush1.msra.mxu0 0.0
  %197 = vmatprep.subr.mxu0 0.0
  %198 = vmatpush1.msra.mxu0 0.0
  %199 = vmatprep.subr.mxu0 0.0
  %200 = vmatpush1.msra.mxu0 0.0
  %201 = vmatprep.subr.mxu0 0.0
  %202 = vmatpush1.msra.mxu0 0.0
  %203 = vmatprep.subr.mxu0 0.0
  %204 = vmatpush1.msra.mxu0 0.0
  %205 = vmatprep.subr.mxu0 0.0
  %206 = vmatpush1.msra.mxu0 0.0
  %207 = vmatprep.subr.mxu0 0.0
  %208 = vmatpush1.msra.mxu0 0.0
  %209 = vmatprep.subr.mxu0 0.0
  %210 = vmatpush1.msra.mxu0 0.0
  %211 = vmatprep.subr.mxu0 0.0
  %212 = vmatpush1.msra.mxu0 0.0
  %213 = vmatprep.subr.mxu0 0.0
  %214 = vmatpush1.msra.mxu0 0.0
  %215 = vmatprep.subr.mxu0 0.0
  %216 = vmatpush1.msra.mxu0 0.0
  %217 = vmatprep.subr.mxu0 0.0
  %218 = vmatpush1.msra.mxu0 0.0
  %219 = vmatprep.subr.mxu0 0.0
  %220 = vmatpush1.msra.mxu0 0.0
  %221 = vmatprep.subr.mxu0 0.0
  %222 = vmatpush1.msra.mxu0 0.0
  %223 = vmatprep.subr.mxu0 0.0
  %224 = vmatpush1.msra.mxu0 0.0
  %225 = vmatprep.mubr.f32.mxu0 0.0
  %226 = vmatmul.mubr.f32.gmra.mrb[0].mxu0 %v150
  %v227 = vpop.f32.mrb[0].mxu0
  %v228 = vadd.f32 %v147, %v227
  %v229 = vpop.f32.mrb[0].mxu0
  %230 = vmatprep.mubr.f32.mxu0 0.0
  %231 = vmatmul.mubr.f32.gmra.mrb[0].mxu0 %v153
  %v232 = vpop.f32.mrb[0].mxu0
  %v233 = vadd.f32 %v147, %v232
  %v234 = vpop.f32.mrb[0].mxu0
  %235 = vmatprep.mubr.f32.mxu0 0.0
  %236 = vmatmul.mubr.f32.gmra.mrb[0].mxu0 %v156
  %v237 = vpop.f32.mrb[0].mxu0
  %v238 = vadd.f32 %v147, %v237
  %v239 = vpop.f32.mrb[0].mxu0
  %240 = vmatprep.mubr.f32.mxu0 0.0
  %241 = vmatmul.mubr.f32.gmra.mrb[0].mxu0 %v159
  %v242 = vpop.f32.mrb[0].mxu0
  %v243 = vadd.f32 %v147, %v242
  %v244 = vpop.f32.mrb[0].mxu0
  %245 = vdwg.mxu0
  %v246 = vtanh.pop %v228
  %vm247 = vcmp.eq.s32.totalorder %v115, 0
  %v248 = vmul.f32 %v246, %v23
  %vm249 = vcmask 261120
  %v250 = vsel %vm249, %v248, 0.0
  %251 = vadd.xlane.f32.xlu0 %v250
  %v252 = vpop.xlane.xlu0 %251
  %v253 = vrot.slane %v252, 4
  %v254 = vadd.f32 %v252, %v253
  %v255 = vrot.slane %v254, 2
  %v256 = vadd.f32 %v254, %v255
  %v257 = vrot.slane %v256, 1
  %v258 = vadd.f32 %v256, %v257
  %v259 = vsel %vm247, %v258, 0.0
  %v261 = vsel %vm249, %v246, 0
  %263 = vmatprep.subr.mxu0 0.0
  %264 = vmatpush1.msra.mxu0 %v24
  %265 = vmatprep.subr.mxu0 0.0
  %266 = vmatpush1.msra.mxu0 %v25
  %267 = vmatprep.subr.mxu0 0.0
  %268 = vmatpush1.msra.mxu0 %v26
  %269 = vmatprep.subr.mxu0 0.0
  %270 = vmatpush1.msra.mxu0 %v27
  %271 = vmatprep.subr.mxu0 0.0
  %272 = vmatpush1.msra.mxu0 0.0
  %273 = vmatprep.subr.mxu0 0.0
  %274 = vmatpush1.msra.mxu0 0.0
  %275 = vmatprep.subr.mxu0 0.0
  %276 = vmatpush1.msra.mxu0 0.0
  %277 = vmatprep.subr.mxu0 0.0
  %278 = vmatpush1.msra.mxu0 0.0
  %279 = vmatprep.subr.mxu0 0.0
  %280 = vmatpush1.msra.mxu0 0.0
  %281 = vmatprep.subr.mxu0 0.0
  %282 = vmatpush1.msra.mxu0 0.0
  %283 = vmatprep.subr.mxu0 0.0
  %284 = vmatpush1.msra.mxu0 0.0
  %285 = vmatprep.subr.mxu0 0.0
  %286 = vmatpush1.msra.mxu0 0.0
  %287 = vmatprep.subr.mxu0 0.0
  %288 = vmatpush1.msra.mxu0 0.0
  %289 = vmatprep.subr.mxu0 0.0
  %290 = vmatpush1.msra.mxu0 0.0
  %291 = vmatprep.subr.mxu0 0.0
  %292 = vmatpush1.msra.mxu0 0.0
  %293 = vmatprep.subr.mxu0 0.0
  %294 = vmatpush1.msra.mxu0 0.0
  %295 = vmatprep.subr.mxu0 0.0
  %296 = vmatpush1.msra.mxu0 0.0
  %297 = vmatprep.subr.mxu0 0.0
  %298 = vmatpush1.msra.mxu0 0.0
  %299 = vmatprep.subr.mxu0 0.0
  %300 = vmatpush1.msra.mxu0 0.0
  %301 = vmatprep.subr.mxu0 0.0
  %302 = vmatpush1.msra.mxu0 0.0
  %303 = vmatprep.subr.mxu0 0.0
  %304 = vmatpush1.msra.mxu0 0.0
  %305 = vmatprep.subr.mxu0 0.0
  %306 = vmatpush1.msra.mxu0 0.0
  %307 = vmatprep.subr.mxu0 0.0
  %308 = vmatpush1.msra.mxu0 0.0
  %309 = vmatprep.subr.mxu0 0.0
  %310 = vmatpush1.msra.mxu0 0.0
  %311 = vmatprep.subr.mxu0 0.0
  %312 = vmatpush1.msra.mxu0 0.0
  %313 = vmatprep.subr.mxu0 0.0
  %314 = vmatpush1.msra.mxu0 0.0
  %315 = vmatprep.subr.mxu0 0.0
  %316 = vmatpush1.msra.mxu0 0.0
  %317 = vmatprep.subr.mxu0 0.0
  %318 = vmatpush1.msra.mxu0 0.0
  %319 = vmatprep.subr.mxu0 0.0
  %320 = vmatpush1.msra.mxu0 0.0
  %321 = vmatprep.subr.mxu0 0.0
  %322 = vmatpush1.msra.mxu0 0.0
  %323 = vmatprep.subr.mxu0 0.0
  %324 = vmatpush1.msra.mxu0 0.0
  %325 = vmatprep.subr.mxu0 0.0
  %326 = vmatpush1.msra.mxu0 0.0
  %327 = vmatprep.mubr.f32.mxu0 0.0
  %328 = vmatmul.mubr.f32.gmra.mrb[0].mxu0 %v261
  %v329 = vpop.f32.mrb[0].mxu0
  %v330 = vadd.f32 0.0, %v329
  %v331 = vpop.f32.mrb[0].mxu0
  %332 = vdwg.mxu0
  %v333 = vadd.f32 %v233, %v330
  %v334 = vtanh.pop %v333
  %vm335 = vcmp.eq.s32.totalorder %v115, 1
  %v336 = vmul.f32 %v334, %v23
  %v337 = vsel %vm249, %v336, 0.0
  %338 = vadd.xlane.f32.xlu0 %v337
  %v339 = vpop.xlane.xlu0 %338
  %v340 = vrot.slane %v339, 4
  %v341 = vadd.f32 %v339, %v340
  %v342 = vrot.slane %v341, 2
  %v343 = vadd.f32 %v341, %v342
  %v344 = vrot.slane %v343, 1
  %v345 = vadd.f32 %v343, %v344
  %v346 = vsel %vm335, %v345, %v259
  %v348 = vsel %vm249, %v334, 0
  %350 = vmatprep.subr.mxu0 0.0
  %351 = vmatpush1.msra.mxu0 %v24
  %352 = vmatprep.subr.mxu0 0.0
  %353 = vmatpush1.msra.mxu0 %v25
  %354 = vmatprep.subr.mxu0 0.0
  %355 = vmatpush1.msra.mxu0 %v26
  %356 = vmatprep.subr.mxu0 0.0
  %357 = vmatpush1.msra.mxu0 %v27
  %358 = vmatprep.subr.mxu0 0.0
  %359 = vmatpush1.msra.mxu0 0.0
  %360 = vmatprep.subr.mxu0 0.0
  %361 = vmatpush1.msra.mxu0 0.0
  %362 = vmatprep.subr.mxu0 0.0
  %363 = vmatpush1.msra.mxu0 0.0
  %364 = vmatprep.subr.mxu0 0.0
  %365 = vmatpush1.msra.mxu0 0.0
  %366 = vmatprep.subr.mxu0 0.0
  %367 = vmatpush1.msra.mxu0 0.0
  %368 = vmatprep.subr.mxu0 0.0
  %369 = vmatpush1.msra.mxu0 0.0
  %370 = vmatprep.subr.mxu0 0.0
  %371 = vmatpush1.msra.mxu0 0.0
  %372 = vmatprep.subr.mxu0 0.0
  %373 = vmatpush1.msra.mxu0 0.0
  %374 = vmatprep.subr.mxu0 0.0
  %375 = vmatpush1.msra.mxu0 0.0
  %376 = vmatprep.subr.mxu0 0.0
  %377 = vmatpush1.msra.mxu0 0.0
  %378 = vmatprep.subr.mxu0 0.0
  %379 = vmatpush1.msra.mxu0 0.0
  %380 = vmatprep.subr.mxu0 0.0
  %381 = vmatpush1.msra.mxu0 0.0
  %382 = vmatprep.subr.mxu0 0.0
  %383 = vmatpush1.msra.mxu0 0.0
  %384 = vmatprep.subr.mxu0 0.0
  %385 = vmatpush1.msra.mxu0 0.0
  %386 = vmatprep.subr.mxu0 0.0
  %387 = vmatpush1.msra.mxu0 0.0
  %388 = vmatprep.subr.mxu0 0.0
  %389 = vmatpush1.msra.mxu0 0.0
  %390 = vmatprep.subr.mxu0 0.0
  %391 = vmatpush1.msra.mxu0 0.0
  %392 = vmatprep.subr.mxu0 0.0
  %393 = vmatpush1.msra.mxu0 0.0
  %394 = vmatprep.subr.mxu0 0.0
  %395 = vmatpush1.msra.mxu0 0.0
  %396 = vmatprep.subr.mxu0 0.0
  %397 = vmatpush1.msra.mxu0 0.0
  %398 = vmatprep.subr.mxu0 0.0
  %399 = vmatpush1.msra.mxu0 0.0
  %400 = vmatprep.subr.mxu0 0.0
  %401 = vmatpush1.msra.mxu0 0.0
  %402 = vmatprep.subr.mxu0 0.0
  %403 = vmatpush1.msra.mxu0 0.0
  %404 = vmatprep.subr.mxu0 0.0
  %405 = vmatpush1.msra.mxu0 0.0
  %406 = vmatprep.subr.mxu0 0.0
  %407 = vmatpush1.msra.mxu0 0.0
  %408 = vmatprep.subr.mxu0 0.0
  %409 = vmatpush1.msra.mxu0 0.0
  %410 = vmatprep.subr.mxu0 0.0
  %411 = vmatpush1.msra.mxu0 0.0
  %412 = vmatprep.subr.mxu0 0.0
  %413 = vmatpush1.msra.mxu0 0.0
  %414 = vmatprep.mubr.f32.mxu0 0.0
  %415 = vmatmul.mubr.f32.gmra.mrb[0].mxu0 %v348
  %v416 = vpop.f32.mrb[0].mxu0
  %v417 = vadd.f32 0.0, %v416
  %v418 = vpop.f32.mrb[0].mxu0
  %419 = vdwg.mxu0
  %v420 = vadd.f32 %v238, %v417
  %v421 = vtanh.pop %v420
  %vm422 = vcmp.eq.s32.totalorder %v115, 2
  %v423 = vmul.f32 %v421, %v23
  %v424 = vsel %vm249, %v423, 0.0
  %425 = vadd.xlane.f32.xlu0 %v424
  %v426 = vpop.xlane.xlu0 %425
  %v427 = vrot.slane %v426, 4
  %v428 = vadd.f32 %v426, %v427
  %v429 = vrot.slane %v428, 2
  %v430 = vadd.f32 %v428, %v429
  %v431 = vrot.slane %v430, 1
  %v432 = vadd.f32 %v430, %v431
  %v433 = vsel %vm422, %v432, %v346
  %v435 = vsel %vm249, %v421, 0
  %437 = vmatprep.subr.mxu0 0.0
  %438 = vmatpush1.msra.mxu0 %v24
  %439 = vmatprep.subr.mxu0 0.0
  %440 = vmatpush1.msra.mxu0 %v25
  %441 = vmatprep.subr.mxu0 0.0
  %442 = vmatpush1.msra.mxu0 %v26
  %443 = vmatprep.subr.mxu0 0.0
  %444 = vmatpush1.msra.mxu0 %v27
  %445 = vmatprep.subr.mxu0 0.0
  %446 = vmatpush1.msra.mxu0 0.0
  %447 = vmatprep.subr.mxu0 0.0
  %448 = vmatpush1.msra.mxu0 0.0
  %449 = vmatprep.subr.mxu0 0.0
  %450 = vmatpush1.msra.mxu0 0.0
  %451 = vmatprep.subr.mxu0 0.0
  %452 = vmatpush1.msra.mxu0 0.0
  %453 = vmatprep.subr.mxu0 0.0
  %454 = vmatpush1.msra.mxu0 0.0
  %455 = vmatprep.subr.mxu0 0.0
  %456 = vmatpush1.msra.mxu0 0.0
  %457 = vmatprep.subr.mxu0 0.0
  %458 = vmatpush1.msra.mxu0 0.0
  %459 = vmatprep.subr.mxu0 0.0
  %460 = vmatpush1.msra.mxu0 0.0
  %461 = vmatprep.subr.mxu0 0.0
  %462 = vmatpush1.msra.mxu0 0.0
  %463 = vmatprep.subr.mxu0 0.0
  %464 = vmatpush1.msra.mxu0 0.0
  %465 = vmatprep.subr.mxu0 0.0
  %466 = vmatpush1.msra.mxu0 0.0
  %467 = vmatprep.subr.mxu0 0.0
  %468 = vmatpush1.msra.mxu0 0.0
  %469 = vmatprep.subr.mxu0 0.0
  %470 = vmatpush1.msra.mxu0 0.0
  %471 = vmatprep.subr.mxu0 0.0
  %472 = vmatpush1.msra.mxu0 0.0
  %473 = vmatprep.subr.mxu0 0.0
  %474 = vmatpush1.msra.mxu0 0.0
  %475 = vmatprep.subr.mxu0 0.0
  %476 = vmatpush1.msra.mxu0 0.0
  %477 = vmatprep.subr.mxu0 0.0
  %478 = vmatpush1.msra.mxu0 0.0
  %479 = vmatprep.subr.mxu0 0.0
  %480 = vmatpush1.msra.mxu0 0.0
  %481 = vmatprep.subr.mxu0 0.0
  %482 = vmatpush1.msra.mxu0 0.0
  %483 = vmatprep.subr.mxu0 0.0
  %484 = vmatpush1.msra.mxu0 0.0
  %485 = vmatprep.subr.mxu0 0.0
  %486 = vmatpush1.msra.mxu0 0.0
  %487 = vmatprep.subr.mxu0 0.0
  %488 = vmatpush1.msra.mxu0 0.0
  %489 = vmatprep.subr.mxu0 0.0
  %490 = vmatpush1.msra.mxu0 0.0
  %491 = vmatprep.subr.mxu0 0.0
  %492 = vmatpush1.msra.mxu0 0.0
  %493 = vmatprep.subr.mxu0 0.0
  %494 = vmatpush1.msra.mxu0 0.0
  %495 = vmatprep.subr.mxu0 0.0
  %496 = vmatpush1.msra.mxu0 0.0
  %497 = vmatprep.subr.mxu0 0.0
  %498 = vmatpush1.msra.mxu0 0.0
  %499 = vmatprep.subr.mxu0 0.0
  %500 = vmatpush1.msra.mxu0 0.0
  %501 = vmatprep.mubr.f32.mxu0 0.0
  %502 = vmatmul.mubr.f32.gmra.mrb[0].mxu0 %v435
  %v503 = vpop.f32.mrb[0].mxu0
  %v504 = vadd.f32 0.0, %v503
  %v505 = vpop.f32.mrb[0].mxu0
  %506 = vdwg.mxu0
  %v507 = vadd.f32 %v243, %v504
  %v508 = vtanh.pop %v507
  %vm509 = vcmp.eq.s32.totalorder %v115, 3
  %v510 = vmul.f32 %v508, %v23
  %v511 = vsel %vm249, %v510, 0.0
  %512 = vadd.xlane.f32.xlu0 %v511
  %v513 = vpop.xlane.xlu0 %512
  %v514 = vrot.slane %v513, 4
  %v515 = vadd.f32 %v513, %v514
  %v516 = vrot.slane %v515, 2
  %v517 = vadd.f32 %v515, %v516
  %v518 = vrot.slane %v517, 1
  %v519 = vadd.f32 %v517, %v518
  %v520 = vsel %vm509, %v519, %v433
  %522 = vset.pattern.permute.xlu0 0
  %523 = vperm.xlu0 %522, %v22
  %v524 = vpop.permute.xlu0 %523
  %v526 = vadd.f32 %v520, %v524
  %527 = vst [vmem:[%s3] sm:$0x1] %v526
  // Predicated region
  $region14: #{text_rnn_forward.1} parent=0 // pred_check
    _
  $region15: #{text_rnn_forward.1} parent=0 // pred_check_branch
    %529 = sbr.rel (0) target = $region17
  $region16: #{text_rnn_forward.1} parent=0 // pred_region
    _
  $region17: #{text_rnn_forward.1} parent=0 // pred_fallthru
    _
  // Predicated region
  $region18: #{text_rnn_forward.1} parent=0 // pred_check
    _
  $region19: #{text_rnn_forward.1} parent=0 // pred_check_branch
    %531 = sbr.rel (0) target = $region21
  $region20: #{text_rnn_forward.1} parent=0 // pred_region
    _
  $region21: #{text_rnn_forward.1} parent=0 // pred_fallthru
    _

</llo_original>
